<compile_context>
chip_gen: v5e
topology: v5e:2x2
jax: 0.10.0
libtpu: 0.0.40
codegen_flags: <defaults>
</compile_context>

<pallas_src>
import functools

import jax
import jax.numpy as jnp
from jax.experimental import pallas as pl
from jax.experimental.pallas import tpu as pltpu


_SQRT_HALF = 0.7071067811865476


def _gelu_exact_f32(x):
    # torch nn.GELU() default is the exact (erf) formulation; keep f32 math.
    return 0.5 * x * (1.0 + jax.lax.erf(x * _SQRT_HALF))


# --------------------------------------------------------------------------- #
# Kernels
# --------------------------------------------------------------------------- #
def mlp_kernel_resident(x_ref, w1_ref, b1_ref, w2_ref, b2_ref, o_ref):
    """Fast path: W1/W2 fully VMEM-resident, single pass per row tile."""
    # x_ref: (tm, C)  w1_ref: (C, H)  b1_ref: (1, H)  w2_ref: (H, C)  b2_ref: (1, C)
    h = jnp.dot(x_ref[...], w1_ref[...], preferred_element_type=jnp.float32)
    h = _gelu_exact_f32(h + b1_ref[...].astype(jnp.float32))
    out = jnp.dot(h.astype(w2_ref.dtype), w2_ref[...],
                  preferred_element_type=jnp.float32)
    # TODO(synk): training-mode dropout would draw a mask via pltpu.prng_seed +
    #             pltpu.prng_random_bits; p=0.0 / eval mode makes it identity.
    o_ref[...] = (out + b2_ref[...].astype(jnp.float32)).astype(o_ref.dtype)


def mlp_kernel_split(x_ref, w1_ref, b1_ref, w2_ref, b2_ref, o_ref, acc_ref):
    """Hidden-dim-split path: accumulate partial c_proj over hidden chunks."""
    # x_ref: (tm, C)  w1_ref: (C, th)  b1_ref: (1, th)
    # w2_ref: (th, C) b2_ref: (1, C)   o_ref: (tm, C)  acc_ref: (tm, C) f32
    j = pl.program_id(1)

    @pl.when(j == 0)
    def _():
        acc_ref[...] = jnp.zeros_like(acc_ref)

    h = jnp.dot(x_ref[...], w1_ref[...], preferred_element_type=jnp.float32)
    h = _gelu_exact_f32(h + b1_ref[...].astype(jnp.float32))
    acc_ref[...] += jnp.dot(h.astype(w2_ref.dtype), w2_ref[...],
                            preferred_element_type=jnp.float32)

    @pl.when(j == pl.num_programs(1) - 1)
    def _():
        # b2 added once per output tile; dropout is identity (p=0.0 / eval).
        o_ref[...] = (acc_ref[...] + b2_ref[...].astype(jnp.float32)
                      ).astype(o_ref.dtype)


# --------------------------------------------------------------------------- #
# Tile planning
# --------------------------------------------------------------------------- #
def _round_up(a, b):
    return (a + b - 1) // b * b


def _cdiv(a, b):
    return (a + b - 1) // b


def _divisor_tiles(n, align, cap):
    """Divisors of n that are multiples of `align` and <= cap, descending."""
    return [d for d in range(align, min(n, cap) + 1, align) if n % d == 0][::-1]


def _vmem_capacity_bytes():
    """Physical VMEM capacity; conservative 64 MiB fallback."""
    try:
        return int(pltpu.get_tpu_info().vmem_capacity_bytes)
    except Exception:  # older jax / missing attribute: assume smallest (v7x)
        return 64 * 1024 * 1024


def _fast_vmem(tm, C, H, dx, dw):
    weights = 2 * (C * H + H * C + H + C) * dw      # double-buffered slabs
    acts = 2 * tm * C * (dx + dx)                    # x-in + out, 2x buffers
    interm = tm * H * (4 + dw) + tm * C * 4          # h(f32) + h(cast) + out(f32)
    return weights + acts + interm


def _split_vmem(tm, th, C, H, dx, dw):
    weights = 2 * (C * th + th * C + th + C) * dw
    acts = 2 * tm * C * (dx + dx)
    acc = tm * C * 4
    interm = tm * th * (4 + dw) + tm * C * 4
    return weights + acts + acc + interm


def _pick_tm(M, fits, cap, min_useful):
    m8 = _round_up(M, 8)
    cap = max(8, min(cap, m8))
    cands = sorted({cap} | {t for t in (1024, 512, 256, 128, 64, 32, 16, 8)
                            if t <= cap}, reverse=True)
    for tm in cands:
        if tm < min_useful:
            return None
        if fits(tm):
            # Prefer a same-order divisor of M: removes the wrapper-side pad of
            # x / slice of the output (extra HBM passes) and wasted MXU rows.
            if M % tm != 0:
                for d in _divisor_tiles(M, 8, tm):
                    if 2 * d > tm and fits(d):
                        return d
            return tm
    return None


def _plan(M, C, H, dx, dw, budget, force_split=False):
    """Pick (mode, tm, th).  mode 'fast' keeps W1/W2 fully resident (th == H)."""
    m8 = _round_up(M, 8)

    if not force_split:
        # Fast path: weights DMA'd exactly once (constant index maps), no
        # accumulator.  Only worth it if a reasonably large row tile still fits.
        fast_fits = lambda tm: _fast_vmem(tm, C, H, dx, dw) <= budget
        tm = _pick_tm(M, fast_fits, 1024, min_useful=min(256, m8))
        if tm is not None:
            # v7x shards the "parallel" row axis over 2 TensorCores: avoid a
            # single giant row tile when there is enough work to split
            # (harmless on 1-TC parts; weights stay resident either way).
            if M > 256 and _cdiv(m8, tm) == 1:
                tm = _round_up(_cdiv(M, 2), 8)
            return "fast", tm, H

    # Split path: tile the hidden dim, f32-accumulate the partial c_proj.
    th_cands = _divisor_tiles(H, 128, 2048) or [H]
    split_fits = lambda tm: any(
        _split_vmem(tm, th, C, H, dx, dw) <= budget for th in th_cands)
    tm = _pick_tm(M, split_fits, 1024, min_useful=8) or 8
    th = next((t for t in th_cands
               if _split_vmem(tm, t, C, H, dx, dw) <= budget), th_cands[-1])
    return "split", tm, th


# --------------------------------------------------------------------------- #
# Wrapper
# --------------------------------------------------------------------------- #
@functools.partial(jax.jit, static_argnames=("force_split",))
def gpt_mlp(x, w1, b1, w2, b2, force_split=False):
    """x: [B, T, C]; w1: [C, 4C]; b1: [1, 4C]; w2: [4C, C]; b2: [1, C]."""
    B, T, C = x.shape
    H = w1.shape[1]
    M = B * T
    dx = jnp.dtype(x.dtype).itemsize
    dw = jnp.dtype(w1.dtype).itemsize

    vmem_cap = _vmem_capacity_bytes()
    vmem_limit = int(vmem_cap * 0.82)   # ~105 MiB on 128 MiB parts, ~52 MiB on v7x
    plan_budget = int(vmem_cap * 0.70)  # headroom for compiler-internal scratch

    mode, tm, th = _plan(M, C, H, dx, dw, plan_budget, force_split=force_split)

    x2d = x.reshape(M, C)
    M_pad = _round_up(M, tm)
    if M_pad != M:
        x2d = jnp.pad(x2d, ((0, M_pad - M), (0, 0)))
    n_i = M_pad // tm
    n_h = H // th if mode == "split" else 1

    weight_bytes = (C * H + H * C + H + C) * dw
    cost = pl.CostEstimate(
        flops=4 * M * C * H,
        transcendentals=M * H,
        bytes_accessed=2 * M * C * dx
        + weight_bytes * (1 if mode == "fast" else n_i),
    )

    if mode == "fast":
        out2d = pl.pallas_call(
            mlp_kernel_resident,
            out_shape=jax.ShapeDtypeStruct((M_pad, C), x.dtype),
            grid_spec=pltpu.PrefetchScalarGridSpec(
                num_scalar_prefetch=0,
                grid=(n_i,),
                in_specs=[
                    pl.BlockSpec((tm, C), lambda i: (i, 0)),   # x rows
                    pl.BlockSpec((C, H), lambda i: (0, 0)),    # W1 (resident)
                    pl.BlockSpec((1, H), lambda i: (0, 0)),    # b1
                    pl.BlockSpec((H, C), lambda i: (0, 0)),    # W2 (resident)
                    pl.BlockSpec((1, C), lambda i: (0, 0)),    # b2
                ],
                out_specs=pl.BlockSpec((tm, C), lambda i: (i, 0)),
            ),
            compiler_params=pltpu.CompilerParams(
                dimension_semantics=("parallel",),
                vmem_limit_bytes=vmem_limit,
            ),
            cost_estimate=cost,
        )(x2d, w1, b1, w2, b2)
    else:
        out2d = pl.pallas_call(
            mlp_kernel_split,
            out_shape=jax.ShapeDtypeStruct((M_pad, C), x.dtype),
            grid_spec=pltpu.PrefetchScalarGridSpec(
                num_scalar_prefetch=0,
                grid=(n_i, n_h),
                in_specs=[
                    pl.BlockSpec((tm, C), lambda i, j: (i, 0)),   # x rows
                    pl.BlockSpec((C, th), lambda i, j: (0, j)),   # W1 hidden slab
                    pl.BlockSpec((1, th), lambda i, j: (0, j)),   # b1 hidden slab
                    pl.BlockSpec((th, C), lambda i, j: (j, 0)),   # W2 hidden slab
                    pl.BlockSpec((1, C), lambda i, j: (0, 0)),    # b2
                ],
                out_specs=pl.BlockSpec((tm, C), lambda i, j: (i, 0)),
                scratch_shapes=[pltpu.VMEM((tm, C), jnp.float32)],
            ),
            compiler_params=pltpu.CompilerParams(
                dimension_semantics=("parallel", "arbitrary"),
                vmem_limit_bytes=vmem_limit,
            ),
            cost_estimate=cost,
        )(x2d, w1, b1, w2, b2)

    if M_pad != M:
        out2d = out2d[:M]
    return out2d.reshape(B, T, C)


def reference_mlp(x, w1, b1, w2, b2):
    h = jnp.dot(x.astype(jnp.float32), w1.astype(jnp.float32)) + b1[0]
    h = _gelu_exact_f32(h)
    return (jnp.dot(h, w2.astype(jnp.float32)) + b2[0]).astype(x.dtype)


if __name__ == "__main__":
    # config: n_embd=32, bias=True, dropout=0.0 ; inputs: batch=2, seq=8
    B, T, C = 2, 8, 32
    H = 4 * C

    key = jax.random.PRNGKey(0)
    kx, k1, k2, k3, k4 = jax.random.split(key, 5)

    x = jax.random.normal(kx, (B, T, C), dtype=jnp.float32)
    # Deterministic "Linear"-style init; weights stored as [in, out] (transposed
    # relative to torch's [out, in]).
    w1 = jax.random.normal(k1, (C, H), dtype=jnp.float32) * (1.0 / jnp.sqrt(C))
    b1 = jax.random.normal(k2, (1, H), dtype=jnp.float32) * 0.02
    w2 = jax.random.normal(k3, (H, C), dtype=jnp.float32) * (1.0 / jnp.sqrt(H))
    b2 = jax.random.normal(k4, (1, C), dtype=jnp.float32) * 0.02

    ref = reference_mlp(x, w1, b1, w2, b2)

    # Exercise both code paths: weights-resident fast path (auto-selected at
    # these shapes) and the hidden-split accumulator path (forced).
    out_fast = jax.block_until_ready(gpt_mlp(x, w1, b1, w2, b2))
    out_split = jax.block_until_ready(gpt_mlp(x, w1, b1, w2, b2, force_split=True))

    assert out_fast.shape == (B, T, C)
    assert out_split.shape == (B, T, C)
    assert jnp.allclose(out_fast, ref, atol=1e-4, rtol=1e-4), "fast path mismatch"
    assert jnp.allclose(out_split, ref, atol=1e-4, rtol=1e-4), "split path mismatch"

    print("KERNEL_OK")
</pallas_src>

<mosaic_0001>
module attributes {stable_mosaic.version = 11 : i64} {
  func.func @mlp_kernel_resident(%arg0: i32, %arg1: memref<16x32xf32, #tpu.memory_space<vmem>>, %arg2: memref<32x128xf32, #tpu.memory_space<vmem>>, %arg3: memref<1x128xf32, #tpu.memory_space<vmem>>, %arg4: memref<128x32xf32, #tpu.memory_space<vmem>>, %arg5: memref<1x32xf32, #tpu.memory_space<vmem>>, %arg6: memref<16x32xf32, #tpu.memory_space<vmem>>) attributes {dimension_semantics = [#tpu.dimension_semantics<parallel>], iteration_bounds = array<i64: 1>, scalar_prefetch = 0 : i64, scratch_operands = 0 : i64, tpu.core_type = #tpu.core_type<tc>, window_params = [{transform_indices = @transform_0, window_bounds = array<i64: 16, 32>}, {pipeline_mode = #tpu.pipeline_mode<synchronous>, transform_indices = @transform_1, window_bounds = array<i64: 32, 128>}, {pipeline_mode = #tpu.pipeline_mode<synchronous>, transform_indices = @transform_2, window_bounds = array<i64: 1, 128>}, {pipeline_mode = #tpu.pipeline_mode<synchronous>, transform_indices = @transform_3, window_bounds = array<i64: 128, 32>}, {pipeline_mode = #tpu.pipeline_mode<synchronous>, transform_indices = @transform_4, window_bounds = array<i64: 1, 32>}, {transform_indices = @transform_5, window_bounds = array<i64: 16, 32>}]} {
    %c0 = arith.constant 0 : index
    %c0_0 = arith.constant 0 : index
    %0 = vector.load %arg1[%c0, %c0_0] : memref<16x32xf32, #tpu.memory_space<vmem>>, vector<16x32xf32>
    %c0_1 = arith.constant 0 : index
    %c0_2 = arith.constant 0 : index
    %1 = vector.load %arg2[%c0_1, %c0_2] : memref<32x128xf32, #tpu.memory_space<vmem>>, vector<32x128xf32>
    %cst = arith.constant dense<0.000000e+00> : vector<16x128xf32>
    %2 = tpu.matmul %0, %1, %cst {dimension_numbers = #tpu.dot_dimension_numbers<[1], [0], [0], [1], [0, 0, 1, 1], [], []>} : vector<16x32xf32>, vector<32x128xf32>, vector<16x128xf32> -> vector<16x128xf32>
    %c0_3 = arith.constant 0 : index
    %c0_4 = arith.constant 0 : index
    %3 = vector.load %arg3[%c0_3, %c0_4] : memref<1x128xf32, #tpu.memory_space<vmem>>, vector<1x128xf32>
    %4 = vector.broadcast %3 : vector<1x128xf32> to vector<16x128xf32>
    %5 = arith.addf %2, %4 : vector<16x128xf32>
    %cst_5 = arith.constant 5.000000e-01 : f32
    %6 = vector.broadcast %cst_5 : f32 to vector<16x128xf32>
    %7 = arith.mulf %6, %5 : vector<16x128xf32>
    %cst_6 = arith.constant 0.707106769 : f32
    %8 = vector.broadcast %cst_6 : f32 to vector<16x128xf32>
    %9 = arith.mulf %5, %8 : vector<16x128xf32>
    %10 = math.erf %9 : vector<16x128xf32>
    %cst_7 = arith.constant 1.000000e+00 : f32
    %11 = vector.broadcast %cst_7 : f32 to vector<16x128xf32>
    %12 = arith.addf %11, %10 : vector<16x128xf32>
    %13 = arith.mulf %7, %12 : vector<16x128xf32>
    %c0_8 = arith.constant 0 : index
    %c0_9 = arith.constant 0 : index
    %14 = vector.load %arg4[%c0_8, %c0_9] : memref<128x32xf32, #tpu.memory_space<vmem>>, vector<128x32xf32>
    %cst_10 = arith.constant dense<0.000000e+00> : vector<16x32xf32>
    %15 = tpu.matmul %13, %14, %cst_10 {dimension_numbers = #tpu.dot_dimension_numbers<[1], [0], [0], [1], [0, 0, 1, 1], [], []>} : vector<16x128xf32>, vector<128x32xf32>, vector<16x32xf32> -> vector<16x32xf32>
    %c0_11 = arith.constant 0 : index
    %c0_12 = arith.constant 0 : index
    %16 = vector.load %arg5[%c0_11, %c0_12] : memref<1x32xf32, #tpu.memory_space<vmem>>, vector<1x32xf32>
    %17 = vector.broadcast %16 : vector<1x32xf32> to vector<16x32xf32>
    %18 = arith.addf %15, %17 : vector<16x32xf32>
    %c0_13 = arith.constant 0 : index
    %c0_14 = arith.constant 0 : index
    %19 = vector.load %arg6[%c0_13, %c0_14] : memref<16x32xf32, #tpu.memory_space<vmem>>, vector<16x32xf32>
    tpu.vector_store %arg6[%c0_13, %c0_14], %18 {strides = array<i32>} : memref<16x32xf32, #tpu.memory_space<vmem>>, vector<16x32xf32>,
    return
  }
  func.func @transform_0(%arg0: i32) -> (i32, i32) {
    %c0_i32 = arith.constant 0 : i32
    %c0_i32_0 = arith.constant 0 : i32
    return %arg0, %c0_i32 : i32, i32
  }
  func.func @transform_1(%arg0: i32) -> (i32, i32) {
    %c0_i32 = arith.constant 0 : i32
    %c0_i32_0 = arith.constant 0 : i32
    %c0_i32_1 = arith.constant 0 : i32
    return %c0_i32, %c0_i32_0 : i32, i32
  }
  func.func @transform_2(%arg0: i32) -> (i32, i32) {
    %c0_i32 = arith.constant 0 : i32
    %c0_i32_0 = arith.constant 0 : i32
    %c0_i32_1 = arith.constant 0 : i32
    return %c0_i32, %c0_i32_0 : i32, i32
  }
  func.func @transform_3(%arg0: i32) -> (i32, i32) {
    %c0_i32 = arith.constant 0 : i32
    %c0_i32_0 = arith.constant 0 : i32
    %c0_i32_1 = arith.constant 0 : i32
    return %c0_i32, %c0_i32_0 : i32, i32
  }
  func.func @transform_4(%arg0: i32) -> (i32, i32) {
    %c0_i32 = arith.constant 0 : i32
    %c0_i32_0 = arith.constant 0 : i32
    %c0_i32_1 = arith.constant 0 : i32
    return %c0_i32, %c0_i32_0 : i32, i32
  }
  func.func @transform_5(%arg0: i32) -> (i32, i32) {
    %c0_i32 = arith.constant 0 : i32
    %c0_i32_0 = arith.constant 0 : i32
    return %arg0, %c0_i32 : i32, i32
  }
}

</mosaic_0001>

<llo_original>
// kernel: gpt_mlp.1
$region0: #{gpt_mlp.1}
  #allocation0 [shape = 'u32[]', space=smem, size = 0x4, offset = 0x4, fixed_abs, tag = 'smem constant byte address 0x4 - core index']
  #allocation1 [shape = 'u32[72,128]{1,0:T(1,128)}', space=vmem, size = 0x9000, scoped, tag = 'internal scratch']
  %s0 = inlined_call_operand.vmem [shape: f32[16,32], index: 0, kind: input, shape index: {}]
  %s1 = inlined_call_operand.vmem [shape: f32[32,128], index: 1, kind: input, shape index: {}]
  %s2 = inlined_call_operand.vmem [shape: f32[1,128], index: 2, kind: input, shape index: {}]
  %s3 = inlined_call_operand.vmem [shape: f32[128,32], index: 3, kind: input, shape index: {}]
  %s4 = inlined_call_operand.vmem [shape: f32[1,32], index: 4, kind: input, shape index: {}]
  %s5 = inlined_call_operand.hbm [shape: f32[16,32], index: 5, kind: output, shape index: {}]
  %s6 = sld [smem:[#allocation0]]
  $region30: #{gpt_mlp.1} parent=0
    _
  %s8 = ssub.s32 1, %s6
  %s9 = scalar_select 0, %s8, %s6
  $region1: #{gpt_mlp.1} parent=0
    #allocation2 [shape = 'u8[8192]{0}', space=vmem, size = 0x2000, scoped, tag = 'output window, operand 0, single buffered']
    #allocation3 [shape = 's32[1]{0}', space=sflag, size = 0x4, scoped, tag = 'scoped memory for gpt_mlp.1']
    %10 = vsyncpa [#allocation3], 0
    // Predicated region
    $region2: #{gpt_mlp.1} parent=1 // pred_check
      _
    $region3: #{gpt_mlp.1} parent=1 // pred_check_branch
      %12 = sbr.rel (0) target = $region5
    $region4: #{gpt_mlp.1} parent=1 // pred_region
      _
    $region5: #{gpt_mlp.1} parent=1 // pred_fallthru
      _
    // Predicated region
    $region6: #{gpt_mlp.1} parent=1 // pred_check
      _
    $region7: #{gpt_mlp.1} parent=1 // pred_check_branch
      %14 = sbr.rel (0) target = $region9
    $region8: #{gpt_mlp.1} parent=1 // pred_region
      _
    $region9: #{gpt_mlp.1} parent=1 // pred_fallthru
      _
    // Predicated region
    $region10: #{gpt_mlp.1} parent=1 // pred_check
      _
    $region11: #{gpt_mlp.1} parent=1 // pred_check_branch
      %16 = sbr.rel (0) target = $region13
    $region12: #{gpt_mlp.1} parent=1 // pred_region
      _
    $region13: #{gpt_mlp.1} parent=1 // pred_fallthru
      _
    // Predicated region
    $region14: #{gpt_mlp.1} parent=1 // pred_check
      _
    $region15: #{gpt_mlp.1} parent=1 // pred_check_branch
      %18 = sbr.rel (0) target = $region17
    $region16: #{gpt_mlp.1} parent=1 // pred_region
      _
    $region17: #{gpt_mlp.1} parent=1 // pred_fallthru
      _
    // Predicated region
    $region18: #{gpt_mlp.1} parent=1 // pred_check
      _
    $region19: #{gpt_mlp.1} parent=1 // pred_check_branch
      %20 = sbr.rel (0) target = $region21
    $region20: #{gpt_mlp.1} parent=1 // pred_region
      _
    $region21: #{gpt_mlp.1} parent=1 // pred_fallthru
      _
    %v21 = vld [vmem:[%s0] sm:$0xff]
    %v22 = vld [vmem:[%s0 + $0x8] sm:$0xff]
    %v23 = vld [vmem:[%s1] sm:$0xff]
    %v24 = vld [vmem:[%s1 + $0x8] sm:$0xff]
    %v25 = vld [vmem:[%s1 + $0x10] sm:$0xff]
    %v26 = vld [vmem:[%s1 + $0x18] sm:$0xff]
    %v27 = vld [vmem:[%s2] sm:$0x1]
    %v29 = vperm.slane %v27, 0
    %vm31 = vcmask 261120
    %v33 = vsel %vm31, %v21, 0
    %v36 = vsel %vm31, %v22, 0
    %38 = vmatpush.msra.mxu0 0.0
    %39 = vmatpush.msra.mxu0 0.0
    %40 = vmatpush.msra.mxu0 0.0
    %41 = vmatpush.msra.mxu0 0.0
    %42 = vmatpush.msra.mxu0 0.0
    %43 = vmatpush.msra.mxu0 0.0
    %44 = vmatpush.msra.mxu0 0.0
    %45 = vmatpush.msra.mxu0 0.0
    %46 = vmatpush.msra.mxu0 0.0
    %47 = vmatpush.msra.mxu0 0.0
    %48 = vmatpush.msra.mxu0 0.0
    %49 = vmatpush.msra.mxu0 0.0
    %50 = vmatpush.msra.mxu0 %v26
    %51 = vmatpush.msra.mxu0 %v25
    %52 = vmatpush.msra.mxu0 %v24
    %53 = vmatpush.msra.mxu0 %v23
    %54 = vmatmul.f32.gmra.mxu0 %v33
    %v55 = vpop.f32.mrf.mxu0
    %v56 = vadd.f32 %v29, %v55
    %57 = vmatmul.f32.gmra.mxu0 %v36
    %v58 = vpop.f32.mrf.mxu0
    %v59 = vadd.f32 %v29, %v58
    %60 = vdwg.mxu0
    %v61 = vmul.f32 %v56, 0.5
    %v62 = vmul.f32 %v59, 0.5
    %v63 = vmul.f32 %v56, 0.70710677
    %v64 = vmul.f32 %v59, 0.70710677
    %v65 = vmul.f32 %v63, %v63
    %v66 = vmin.f32 16.0, %v65
    %v67 = vmul.f32 %v66, 2.1237322e-06
    %v68 = vadd.f32 %v67, 0.00028619796
    %v69 = vmul.f32 %v66, %v68
    %v70 = vadd.f32 %v69, 0.0036580483
    %v71 = vmul.f32 %v66, %v70
    %v72 = vadd.f32 %v71, 0.05243302
    %v73 = vmul.f32 %v66, %v72
    %v74 = vadd.f32 %v73, 0.18741608
    %v75 = vmul.f32 %v66, %v74
    %v76 = vadd.f32 %v75, 1.1283791
    %v77 = vmul.f32 %v63, %v76
    %v78 = vmul.f32 %v66, 3.8918573e-05
    %v79 = vadd.f32 %v78, 0.001143296
    %v80 = vmul.f32 %v66, %v79
    %v81 = vadd.f32 %v80, 0.014752088
    %v82 = vmul.f32 %v66, %v81
    %v83 = vadd.f32 %v82, 0.112945676
    %v84 = vmul.f32 %v66, %v83
    %v85 = vadd.f32 %v84, 0.4994258
    %v86 = vmul.f32 %v66, %v85
    %v87 = vadd.f32 %v86, 1.0
    %v88 = vrcp.pop %v87
    %v89 = vmul.f32 %v87, %v88
    %v90 = vsub.f32 1.0, %v89
    %v91 = vmul.f32 %v88, %v90
    %v92 = vadd.f32 %v88, %v91
    %vm93 = vweird.f32 %v87
    %vm94 = vweird.f32 %v88
    %vm95 = vmor %vm93, %vm94
    %v96 = vsel %vm95, %v88, %v92
    %v97 = vand.u32 2147483647, %v87
    %vm98 = vcmp.eq.f32.partialorder %v97, 8.507059e+37
    %v99 = vand.u32 %v87, 2147483648
    %v100 = vor.u32 1.1754944e-38, %v99
    %v101 = vsel %vm98, %v100, %v96
    %v102 = vmul.f32 %v77, %v101
    %v103 = vmin.f32 %v102, 1.0
    %v104 = vmax.f32 %v103, -1.0
    %v105 = vmul.f32 %v64, %v64
    %v106 = vmin.f32 16.0, %v105
    %v107 = vmul.f32 %v106, 2.1237322e-06
    %v108 = vadd.f32 %v107, 0.00028619796
    %v109 = vmul.f32 %v106, %v108
    %v110 = vadd.f32 %v109, 0.0036580483
    %v111 = vmul.f32 %v106, %v110
    %v112 = vadd.f32 %v111, 0.05243302
    %v113 = vmul.f32 %v106, %v112
    %v114 = vadd.f32 %v113, 0.18741608
    %v115 = vmul.f32 %v106, %v114
    %v116 = vadd.f32 %v115, 1.1283791
    %v117 = vmul.f32 %v64, %v116
    %v118 = vmul.f32 %v106, 3.8918573e-05
    %v119 = vadd.f32 %v118, 0.001143296
    %v120 = vmul.f32 %v106, %v119
    %v121 = vadd.f32 %v120, 0.014752088
    %v122 = vmul.f32 %v106, %v121
    %v123 = vadd.f32 %v122, 0.112945676
    %v124 = vmul.f32 %v106, %v123
    %v125 = vadd.f32 %v124, 0.4994258
    %v126 = vmul.f32 %v106, %v125
    %v127 = vadd.f32 %v126, 1.0
    %v128 = vrcp.pop %v127
    %v129 = vmul.f32 %v127, %v128
    %v130 = vsub.f32 1.0, %v129
    %v131 = vmul.f32 %v128, %v130
    %v132 = vadd.f32 %v128, %v131
    %vm133 = vweird.f32 %v127
    %vm134 = vweird.f32 %v128
    %vm135 = vmor %vm133, %vm134
    %v136 = vsel %vm135, %v128, %v132
    %v137 = vand.u32 2147483647, %v127
    %vm138 = vcmp.eq.f32.partialorder %v137, 8.507059e+37
    %v139 = vand.u32 %v127, 2147483648
    %v140 = vor.u32 1.1754944e-38, %v139
    %v141 = vsel %vm138, %v140, %v136
    %v142 = vmul.f32 %v117, %v141
    %v143 = vmin.f32 %v142, 1.0
    %v144 = vmax.f32 %v143, -1.0
    %v145 = vadd.f32 %v104, 1.0
    %v146 = vadd.f32 %v144, 1.0
    %v147 = vmul.f32 %v61, %v145
    %v148 = vmul.f32 %v62, %v146
    %v149 = vld [vmem:[%s3] sm:$0xff]
    %v150 = vld [vmem:[%s3 + $0x8] sm:$0xff]
    %v151 = vld [vmem:[%s3 + $0x10] sm:$0xff]
    %v152 = vld [vmem:[%s3 + $0x18] sm:$0xff]
    %v153 = vld [vmem:[%s3 + $0x20] sm:$0xff]
    %v154 = vld [vmem:[%s3 + $0x28] sm:$0xff]
    %v155 = vld [vmem:[%s3 + $0x30] sm:$0xff]
    %v156 = vld [vmem:[%s3 + $0x38] sm:$0xff]
    %v157 = vld [vmem:[%s3 + $0x40] sm:$0xff]
    %v158 = vld [vmem:[%s3 + $0x48] sm:$0xff]
    %v159 = vld [vmem:[%s3 + $0x50] sm:$0xff]
    %v160 = vld [vmem:[%s3 + $0x58] sm:$0xff]
    %v161 = vld [vmem:[%s3 + $0x60] sm:$0xff]
    %v162 = vld [vmem:[%s3 + $0x68] sm:$0xff]
    %v163 = vld [vmem:[%s3 + $0x70] sm:$0xff]
    %v164 = vld [vmem:[%s3 + $0x78] sm:$0xff]
    %v165 = vld [vmem:[%s4] sm:$0x1]
    %v167 = vperm.slane %v165, 0
    %169 = vmatpush.msra.mxu0 %v164
    %170 = vmatpush.msra.mxu0 %v163
    %171 = vmatpush.msra.mxu0 %v162
    %172 = vmatpush.msra.mxu0 %v161
    %173 = vmatpush.msra.mxu0 %v160
    %174 = vmatpush.msra.mxu0 %v159
    %175 = vmatpush.msra.mxu0 %v158
    %176 = vmatpush.msra.mxu0 %v157
    %177 = vmatpush.msra.mxu0 %v156
    %178 = vmatpush.msra.mxu0 %v155
    %179 = vmatpush.msra.mxu0 %v154
    %180 = vmatpush.msra.mxu0 %v153
    %181 = vmatpush.msra.mxu0 %v152
    %182 = vmatpush.msra.mxu0 %v151
    %183 = vmatpush.msra.mxu0 %v150
    %184 = vmatpush.msra.mxu0 %v149
    %185 = vmatmul.f32.gmra.mxu0 %v147
    %v186 = vpop.f32.mrf.mxu0
    %v187 = vadd.f32 %v167, %v186
    %188 = vmatmul.f32.gmra.mxu0 %v148
    %v189 = vpop.f32.mrf.mxu0
    %v190 = vadd.f32 %v167, %v189
    %191 = vdwg.mxu0
    %192 = vst.msk [vmem:[#allocation2] sm:$0xff] %vm31, %v187
    %193 = vst.msk [vmem:[#allocation2 + $0x8] sm:$0xff] %vm31, %v190
    // Predicated region
    $region22: #{gpt_mlp.1} parent=1 // pred_check
      _
    $region23: #{gpt_mlp.1} parent=1 // pred_check_branch
      %195 = sbr.rel (0) target = $region25
    $region24: #{gpt_mlp.1} parent=1 // pred_region
      %197 = vsyncadd [#allocation3], 0
      %s198 = sshll.u32 [#allocation2], 4
      %s199 = int_to_ptr.vmem [resolvable:$true] %s198
      %s200 = sshll.u32 %s5, 4
      %s201 = int_to_ptr.hbm [resolvable:$true] %s200
      %206 = dma.vmem_to_hbm [thread:$0]  %s199, 256, %s201, [#allocation3], 128, 128, 8
    $region25: #{gpt_mlp.1} parent=1 // pred_fallthru
      _
    // Predicated region
    $region26: #{gpt_mlp.1} parent=1 // pred_check
      _
    $region27: #{gpt_mlp.1} parent=1 // pred_check_branch
      %208 = sbr.rel (0) target = $region29
    $region28: #{gpt_mlp.1} parent=1 // pred_region
      %210 = dma.done [#allocation3], 256
    $region29: #{gpt_mlp.1} parent=1 // pred_fallthru
      _
    %211 = vsyncpa [#allocation3], 1

</llo_original>
